<compile_context>
chip_gen: v7x
topology: tpu7x:2x2x1
jax: 0.10.0
libtpu: 0.0.40
codegen_flags: <defaults>
</compile_context>

<pallas_src>
import jax
import jax.numpy as jnp
from jax.experimental import pallas as pl
from jax.experimental.pallas import tpu as pltpu

STATE_DIM = 12
ACTION_DIM = 6
HIDDEN_DIM = 128
TASK_EMBED_DIM = 32
TASK_DIM = 5
COLLAB_DIM = 6
COLLAB_EMBED_DIM = 16

IN_DIM = STATE_DIM + TASK_DIM + COLLAB_DIM                      # 23
H1_DIM = HIDDEN_DIM + TASK_EMBED_DIM + COLLAB_EMBED_DIM         # 176
TC_DIM = TASK_EMBED_DIM + COLLAB_EMBED_DIM                      # 48
HEAD_PAD = 128                                                  # lane-dense head


def _policy_kernel(
    # inputs
    x_ref,                                  # (B, 23) f32  [state | task | collab]
    # fused first layer (block-diagonal over the three encoders)
    w1_ref, b1_ref,                         # (23, 176) bf16, (1, 176) f32
    # second state-encoder layer
    se_w2_ref, se_b2_ref,                   # (128, 128) bf16, (1, 128) f32
    # policy layer 1 (state block + fused task/collab block)
    p_w1s_ref, p_w1tc_ref, p_b1_ref,        # (128,128) bf16, (48,128) bf16, (1,128) f32
    # policy layer 2
    p_w2_ref, p_b2_ref,                     # (128, 128) bf16, (1, 128) f32
    # fused, lane-padded action+value head
    head_w_ref, head_b_ref,                 # (128, 128) bf16, (1, 128) f32
    # output
    out_ref,                                # (B, 128) f32: [probs(6) | value(1) | pad]
):
    bf16 = jnp.bfloat16
    relu = lambda v: jnp.maximum(v, 0.0)

    def mm(a, w_ref):
        # bf16 operands into the MXU, f32 accumulation.
        return jnp.dot(a.astype(bf16), w_ref[...], preferred_element_type=jnp.float32)

    x = x_ref[...]

    # Fused stage 1: state_encoder[0] + task_encoder + collaboration_encoder.
    h1 = relu(mm(x, w1_ref) + b1_ref[...])              # (B, 176)
    h_state = h1[:, :HIDDEN_DIM]                        # (B, 128) lane-tile aligned
    tc_enc = h1[:, HIDDEN_DIM:]                         # (B, 48)  lane-tile aligned

    # state_encoder[1]
    s_enc = relu(mm(h_state, se_w2_ref) + se_b2_ref[...])

    # policy_network on concat([s_enc, t_enc, c_enc]) == sum of partial matmuls
    p1 = relu(mm(s_enc, p_w1s_ref) + mm(tc_enc, p_w1tc_ref) + p_b1_ref[...])
    p2 = relu(mm(p1, p_w2_ref) + p_b2_ref[...])

    # Fused heads: lanes 0..5 = action logits, lane 6 = value, lanes 7.. = pad.
    head = mm(p2, head_w_ref) + head_b_ref[...]         # (B, 128) f32

    lane = jax.lax.broadcasted_iota(jnp.int32, head.shape, 1)
    is_action = lane < ACTION_DIM

    # Stable softmax over the 6 action lanes only.
    logits = jnp.where(is_action, head, -jnp.inf)
    m = jnp.max(logits, axis=1, keepdims=True)
    e = jnp.where(is_action, jnp.exp(logits - m), 0.0)
    denom = jnp.sum(e, axis=1, keepdims=True)
    probs = e * pl.reciprocal(denom, approx=True)

    # Single lane-dense store: probs in action lanes, raw head (value) in lane 6.
    out_ref[...] = jnp.where(lane == ACTION_DIM, head, probs)


def make_params(key):
    """Deterministic synthetic parameters, PyTorch layout: W [in,out], b [1,out]."""
    shapes = dict(
        se_w1=(STATE_DIM, HIDDEN_DIM), se_b1=(1, HIDDEN_DIM),
        se_w2=(HIDDEN_DIM, HIDDEN_DIM), se_b2=(1, HIDDEN_DIM),
        te_w=(TASK_DIM, TASK_EMBED_DIM), te_b=(1, TASK_EMBED_DIM),
        ce_w=(COLLAB_DIM, COLLAB_EMBED_DIM), ce_b=(1, COLLAB_EMBED_DIM),
        p_w1s=(HIDDEN_DIM, HIDDEN_DIM),
        p_w1t=(TASK_EMBED_DIM, HIDDEN_DIM),
        p_w1c=(COLLAB_EMBED_DIM, HIDDEN_DIM),
        p_b1=(1, HIDDEN_DIM),
        p_w2=(HIDDEN_DIM, HIDDEN_DIM), p_b2=(1, HIDDEN_DIM),
        a_w=(HIDDEN_DIM, ACTION_DIM), a_b=(1, ACTION_DIM),
        v_w=(HIDDEN_DIM, 1), v_b=(1, 1),
    )
    params = {}
    for name, shp in shapes.items():
        key, sub = jax.random.split(key)
        scale = 1.0 / jnp.sqrt(jnp.float32(shp[0]))
        params[name] = jax.random.normal(sub, shp, dtype=jnp.float32) * scale
    return params


FUSED_ORDER = [
    "w1", "b1", "se_w2", "se_b2",
    "p_w1s", "p_w1tc", "p_b1", "p_w2", "p_b2",
    "head_w", "head_b",
]


def fuse_params(params):
    """One-time host-side weight fusion + bf16 cast (biases stay f32)."""
    f32, bf16 = jnp.float32, jnp.bfloat16

    # Block-diagonal fusion of the three first-layer encoders: (23, 176).
    w1 = jnp.zeros((IN_DIM, H1_DIM), f32)
    w1 = w1.at[:STATE_DIM, :HIDDEN_DIM].set(params["se_w1"])
    w1 = w1.at[STATE_DIM:STATE_DIM + TASK_DIM,
               HIDDEN_DIM:HIDDEN_DIM + TASK_EMBED_DIM].set(params["te_w"])
    w1 = w1.at[STATE_DIM + TASK_DIM:,
               HIDDEN_DIM + TASK_EMBED_DIM:].set(params["ce_w"])
    b1 = jnp.concatenate([params["se_b1"], params["te_b"], params["ce_b"]], axis=1)

    # Fused task/collab rows of the policy first layer: (48, 128).
    p_w1tc = jnp.concatenate([params["p_w1t"], params["p_w1c"]], axis=0)

    # Fused + lane-padded action/value head: (128, 128) and (1, 128).
    head_w = jnp.zeros((HIDDEN_DIM, HEAD_PAD), f32)
    head_w = head_w.at[:, :ACTION_DIM].set(params["a_w"])
    head_w = head_w.at[:, ACTION_DIM:ACTION_DIM + 1].set(params["v_w"])
    head_b = jnp.zeros((1, HEAD_PAD), f32)
    head_b = head_b.at[:, :ACTION_DIM].set(params["a_b"])
    head_b = head_b.at[:, ACTION_DIM:ACTION_DIM + 1].set(params["v_b"])

    return dict(
        w1=w1.astype(bf16), b1=b1,
        se_w2=params["se_w2"].astype(bf16), se_b2=params["se_b2"],
        p_w1s=params["p_w1s"].astype(bf16),
        p_w1tc=p_w1tc.astype(bf16),
        p_b1=params["p_b1"],
        p_w2=params["p_w2"].astype(bf16), p_b2=params["p_b2"],
        head_w=head_w.astype(bf16), head_b=head_b,
    )


@jax.jit
def u6_low_level_policy(state, task_features, collaboration_features, fused_params):
    B = state.shape[0]
    # Single (B, 23) input tensor: collapses 3 tiny input DMAs into 1.
    x = jnp.concatenate([state, task_features, collaboration_features], axis=1)

    weight_elems = (IN_DIM * H1_DIM + 3 * HIDDEN_DIM * HIDDEN_DIM
                    + TC_DIM * HIDDEN_DIM + HIDDEN_DIM * HEAD_PAD)
    bias_elems = H1_DIM + 4 * HIDDEN_DIM
    cost = pl.CostEstimate(
        flops=2 * B * weight_elems,
        transcendentals=B * (HEAD_PAD + 1),
        bytes_accessed=2 * weight_elems + 4 * bias_elems
                       + 4 * B * IN_DIM + 4 * B * HEAD_PAD,
    )

    vmem = pl.BlockSpec(memory_space=pltpu.MemorySpace.VMEM)
    args = [x] + [fused_params[n] for n in FUSED_ORDER]

    out = pl.pallas_call(
        _policy_kernel,
        out_shape=jax.ShapeDtypeStruct((B, HEAD_PAD), jnp.float32),
        in_specs=[vmem] * len(args),
        out_specs=vmem,
        cost_estimate=cost,
    )(*args)

    action_probs = out[:, :ACTION_DIM]
    state_value = out[:, ACTION_DIM:ACTION_DIM + 1]
    return action_probs, state_value


def reference_forward(state, task, collab, params):
    """Pure-JAX f32 reference reproducing the PyTorch forward (explicit concat)."""
    relu = lambda x: jnp.maximum(x, 0.0)
    s = relu(state @ params["se_w1"] + params["se_b1"])
    s = relu(s @ params["se_w2"] + params["se_b2"])
    t = relu(task @ params["te_w"] + params["te_b"])
    c = relu(collab @ params["ce_w"] + params["ce_b"])
    combined = jnp.concatenate([s, t, c], axis=1)
    w1 = jnp.concatenate([params["p_w1s"], params["p_w1t"], params["p_w1c"]], axis=0)
    p = relu(combined @ w1 + params["p_b1"])
    p = relu(p @ params["p_w2"] + params["p_b2"])
    logits = p @ params["a_w"] + params["a_b"]
    probs = jax.nn.softmax(logits, axis=1)
    value = p @ params["v_w"] + params["v_b"]
    return probs, value


def reference_forward_bf16(state, task, collab, params):
    """Same forward with bf16 matmul operands / f32 accumulation (matches kernel)."""
    bf16 = jnp.bfloat16
    relu = lambda x: jnp.maximum(x, 0.0)

    def lin(x, w, b):
        return jnp.dot(x.astype(bf16), w.astype(bf16),
                       preferred_element_type=jnp.float32) + b

    s = relu(lin(state, params["se_w1"], params["se_b1"]))
    s = relu(lin(s, params["se_w2"], params["se_b2"]))
    t = relu(lin(task, params["te_w"], params["te_b"]))
    c = relu(lin(collab, params["ce_w"], params["ce_b"]))
    combined = jnp.concatenate([s, t, c], axis=1)
    w1 = jnp.concatenate([params["p_w1s"], params["p_w1t"], params["p_w1c"]], axis=0)
    p = relu(lin(combined, w1, params["p_b1"]))
    p = relu(lin(p, params["p_w2"], params["p_b2"]))
    logits = lin(p, params["a_w"], params["a_b"])
    probs = jax.nn.softmax(logits, axis=1)
    value = lin(p, params["v_w"], params["v_b"])
    return probs, value


if __name__ == "__main__":
    key = jax.random.PRNGKey(0)
    k_params, k_state, k_task, k_collab = jax.random.split(key, 4)

    params = make_params(k_params)
    fused = fuse_params(params)

    B = 8  # keep batch a multiple of 8 (f32 sublane); pad on the caller side otherwise
    state = jax.random.normal(k_state, (B, STATE_DIM), dtype=jnp.float32)
    task = jax.random.normal(k_task, (B, TASK_DIM), dtype=jnp.float32)
    collab = jax.random.normal(k_collab, (B, COLLAB_DIM), dtype=jnp.float32)

    probs, value = u6_low_level_policy(state, task, collab, fused)
    jax.block_until_ready((probs, value))

    assert probs.shape == (B, ACTION_DIM) and value.shape == (B, 1)

    # Tight check vs. bf16-matched reference (only approx-reciprocal / summation
    # order differ).
    bf_probs, bf_value = reference_forward_bf16(state, task, collab, params)
    assert jnp.allclose(probs, bf_probs, atol=1e-2, rtol=1e-2)
    assert jnp.allclose(value, bf_value, atol=1e-3, rtol=1e-3)

    # Loose check vs. full-f32 reference (bf16 weights => ~1e-2 level tolerance).
    ref_probs, ref_value = reference_forward(state, task, collab, params)
    assert jnp.allclose(probs, ref_probs, atol=5e-2, rtol=5e-2)
    assert jnp.allclose(value, ref_value, atol=5e-2, rtol=5e-2)

    # Softmax normalization (approx reciprocal loosens this slightly).
    assert jnp.allclose(jnp.sum(probs, axis=1), 1.0, atol=1e-2)

    print("KERNEL_OK")
</pallas_src>

<mosaic_0001>
module attributes {stable_mosaic.version = 11 : i64} {
  func.func @_policy_kernel(%arg0: memref<8x23xf32, #tpu.memory_space<vmem>>, %arg1: memref<23x176xbf16, #tpu.memory_space<vmem>>, %arg2: memref<1x176xf32, #tpu.memory_space<vmem>>, %arg3: memref<128x128xbf16, #tpu.memory_space<vmem>>, %arg4: memref<1x128xf32, #tpu.memory_space<vmem>>, %arg5: memref<128x128xbf16, #tpu.memory_space<vmem>>, %arg6: memref<48x128xbf16, #tpu.memory_space<vmem>>, %arg7: memref<1x128xf32, #tpu.memory_space<vmem>>, %arg8: memref<128x128xbf16, #tpu.memory_space<vmem>>, %arg9: memref<1x128xf32, #tpu.memory_space<vmem>>, %arg10: memref<128x128xbf16, #tpu.memory_space<vmem>>, %arg11: memref<1x128xf32, #tpu.memory_space<vmem>>, %arg12: memref<8x128xf32, #tpu.memory_space<vmem>>) attributes {dimension_semantics = [], scalar_prefetch = 0 : i64, scratch_operands = 0 : i64, tpu.core_type = #tpu.core_type<tc>} {
    %c0 = arith.constant 0 : index
    %c0_0 = arith.constant 0 : index
    %0 = vector.load %arg0[%c0, %c0_0] : memref<8x23xf32, #tpu.memory_space<vmem>>, vector<8x23xf32>
    %1 = arith.truncf %0 : vector<8x23xf32> to vector<8x23xbf16>
    %c0_1 = arith.constant 0 : index
    %c0_2 = arith.constant 0 : index
    %2 = vector.load %arg1[%c0_1, %c0_2] : memref<23x176xbf16, #tpu.memory_space<vmem>>, vector<23x176xbf16>
    %cst = arith.constant dense<0.000000e+00> : vector<8x176xf32>
    %3 = tpu.matmul %1, %2, %cst {dimension_numbers = #tpu.dot_dimension_numbers<[1], [0], [0], [1], [0, 0, 1, 1], [], []>} : vector<8x23xbf16>, vector<23x176xbf16>, vector<8x176xf32> -> vector<8x176xf32>
    %c0_3 = arith.constant 0 : index
    %c0_4 = arith.constant 0 : index
    %4 = vector.load %arg2[%c0_3, %c0_4] : memref<1x176xf32, #tpu.memory_space<vmem>>, vector<1x176xf32>
    %5 = vector.broadcast %4 : vector<1x176xf32> to vector<8x176xf32>
    %6 = arith.addf %3, %5 : vector<8x176xf32>
    %cst_5 = arith.constant 0.000000e+00 : f32
    %7 = vector.broadcast %cst_5 : f32 to vector<8x176xf32>
    %8 = arith.maximumf %6, %7 : vector<8x176xf32>
    %9 = vector.extract_strided_slice %8 {offsets = [0, 0], sizes = [8, 128], strides = [1, 1]} : vector<8x176xf32> to vector<8x128xf32>
    %10 = vector.extract_strided_slice %8 {offsets = [0, 128], sizes = [8, 48], strides = [1, 1]} : vector<8x176xf32> to vector<8x48xf32>
    %11 = arith.truncf %9 : vector<8x128xf32> to vector<8x128xbf16>
    %c0_6 = arith.constant 0 : index
    %c0_7 = arith.constant 0 : index
    %12 = vector.load %arg3[%c0_6, %c0_7] : memref<128x128xbf16, #tpu.memory_space<vmem>>, vector<128x128xbf16>
    %cst_8 = arith.constant dense<0.000000e+00> : vector<8x128xf32>
    %13 = tpu.matmul %11, %12, %cst_8 {dimension_numbers = #tpu.dot_dimension_numbers<[1], [0], [0], [1], [0, 0, 1, 1], [], []>} : vector<8x128xbf16>, vector<128x128xbf16>, vector<8x128xf32> -> vector<8x128xf32>
    %c0_9 = arith.constant 0 : index
    %c0_10 = arith.constant 0 : index
    %14 = vector.load %arg4[%c0_9, %c0_10] : memref<1x128xf32, #tpu.memory_space<vmem>>, vector<1x128xf32>
    %15 = vector.broadcast %14 : vector<1x128xf32> to vector<8x128xf32>
    %16 = arith.addf %13, %15 : vector<8x128xf32>
    %cst_11 = arith.constant 0.000000e+00 : f32
    %17 = vector.broadcast %cst_11 : f32 to vector<8x128xf32>
    %18 = arith.maximumf %16, %17 : vector<8x128xf32>
    %19 = arith.truncf %18 : vector<8x128xf32> to vector<8x128xbf16>
    %c0_12 = arith.constant 0 : index
    %c0_13 = arith.constant 0 : index
    %20 = vector.load %arg5[%c0_12, %c0_13] : memref<128x128xbf16, #tpu.memory_space<vmem>>, vector<128x128xbf16>
    %cst_14 = arith.constant dense<0.000000e+00> : vector<8x128xf32>
    %21 = tpu.matmul %19, %20, %cst_14 {dimension_numbers = #tpu.dot_dimension_numbers<[1], [0], [0], [1], [0, 0, 1, 1], [], []>} : vector<8x128xbf16>, vector<128x128xbf16>, vector<8x128xf32> -> vector<8x128xf32>
    %22 = arith.truncf %10 : vector<8x48xf32> to vector<8x48xbf16>
    %c0_15 = arith.constant 0 : index
    %c0_16 = arith.constant 0 : index
    %23 = vector.load %arg6[%c0_15, %c0_16] : memref<48x128xbf16, #tpu.memory_space<vmem>>, vector<48x128xbf16>
    %cst_17 = arith.constant dense<0.000000e+00> : vector<8x128xf32>
    %24 = tpu.matmul %22, %23, %cst_17 {dimension_numbers = #tpu.dot_dimension_numbers<[1], [0], [0], [1], [0, 0, 1, 1], [], []>} : vector<8x48xbf16>, vector<48x128xbf16>, vector<8x128xf32> -> vector<8x128xf32>
    %25 = arith.addf %21, %24 : vector<8x128xf32>
    %c0_18 = arith.constant 0 : index
    %c0_19 = arith.constant 0 : index
    %26 = vector.load %arg7[%c0_18, %c0_19] : memref<1x128xf32, #tpu.memory_space<vmem>>, vector<1x128xf32>
    %27 = vector.broadcast %26 : vector<1x128xf32> to vector<8x128xf32>
    %28 = arith.addf %25, %27 : vector<8x128xf32>
    %cst_20 = arith.constant 0.000000e+00 : f32
    %29 = vector.broadcast %cst_20 : f32 to vector<8x128xf32>
    %30 = arith.maximumf %28, %29 : vector<8x128xf32>
    %31 = arith.truncf %30 : vector<8x128xf32> to vector<8x128xbf16>
    %c0_21 = arith.constant 0 : index
    %c0_22 = arith.constant 0 : index
    %32 = vector.load %arg8[%c0_21, %c0_22] : memref<128x128xbf16, #tpu.memory_space<vmem>>, vector<128x128xbf16>
    %cst_23 = arith.constant dense<0.000000e+00> : vector<8x128xf32>
    %33 = tpu.matmul %31, %32, %cst_23 {dimension_numbers = #tpu.dot_dimension_numbers<[1], [0], [0], [1], [0, 0, 1, 1], [], []>} : vector<8x128xbf16>, vector<128x128xbf16>, vector<8x128xf32> -> vector<8x128xf32>
    %c0_24 = arith.constant 0 : index
    %c0_25 = arith.constant 0 : index
    %34 = vector.load %arg9[%c0_24, %c0_25] : memref<1x128xf32, #tpu.memory_space<vmem>>, vector<1x128xf32>
    %35 = vector.broadcast %34 : vector<1x128xf32> to vector<8x128xf32>
    %36 = arith.addf %33, %35 : vector<8x128xf32>
    %cst_26 = arith.constant 0.000000e+00 : f32
    %37 = vector.broadcast %cst_26 : f32 to vector<8x128xf32>
    %38 = arith.maximumf %36, %37 : vector<8x128xf32>
    %39 = arith.truncf %38 : vector<8x128xf32> to vector<8x128xbf16>
    %c0_27 = arith.constant 0 : index
    %c0_28 = arith.constant 0 : index
    %40 = vector.load %arg10[%c0_27, %c0_28] : memref<128x128xbf16, #tpu.memory_space<vmem>>, vector<128x128xbf16>
    %cst_29 = arith.constant dense<0.000000e+00> : vector<8x128xf32>
    %41 = tpu.matmul %39, %40, %cst_29 {dimension_numbers = #tpu.dot_dimension_numbers<[1], [0], [0], [1], [0, 0, 1, 1], [], []>} : vector<8x128xbf16>, vector<128x128xbf16>, vector<8x128xf32> -> vector<8x128xf32>
    %c0_30 = arith.constant 0 : index
    %c0_31 = arith.constant 0 : index
    %42 = vector.load %arg11[%c0_30, %c0_31] : memref<1x128xf32, #tpu.memory_space<vmem>>, vector<1x128xf32>
    %43 = vector.broadcast %42 : vector<1x128xf32> to vector<8x128xf32>
    %44 = arith.addf %41, %43 : vector<8x128xf32>
    %45 = tpu.iota {dimensions = array<i32: 1>} : vector<8x128xi32>
    %c6_i32 = arith.constant 6 : i32
    %46 = vector.broadcast %c6_i32 : i32 to vector<8x128xi32>
    %47 = arith.cmpi slt, %45, %46 : vector<8x128xi32>
    %cst_32 = arith.constant 0xFF800000 : f32
    %48 = vector.broadcast %cst_32 : f32 to vector<8x128xf32>
    %49 = arith.select %47, %44, %48 : vector<8x128xi1>, vector<8x128xf32>
    %cst_33 = arith.constant dense<0xFF800000> : vector<8xf32>
    %50 = vector.multi_reduction <maximumf>, %49, %cst_33 [1] : vector<8x128xf32> to vector<8xf32>
    %51 = vector.shape_cast %50 : vector<8xf32> to vector<8x1xf32>
    %52 = vector.broadcast %51 : vector<8x1xf32> to vector<8x128xf32>
    %53 = arith.subf %49, %52 : vector<8x128xf32>
    %54 = math.exp %53 : vector<8x128xf32>
    %cst_34 = arith.constant 0.000000e+00 : f32
    %55 = vector.broadcast %cst_34 : f32 to vector<8x128xf32>
    %56 = arith.select %47, %54, %55 : vector<8x128xi1>, vector<8x128xf32>
    %cst_35 = arith.constant dense<0.000000e+00> : vector<8xf32>
    %57 = vector.multi_reduction <add>, %56, %cst_35 [1] : vector<8x128xf32> to vector<8xf32>
    %58 = vector.shape_cast %57 : vector<8xf32> to vector<8x1xf32>
    %59 = tpu.reciprocal %58 {approx = true} : vector<8x1xf32> -> vector<8x1xf32>
    %60 = vector.broadcast %59 : vector<8x1xf32> to vector<8x128xf32>
    %61 = arith.mulf %56, %60 : vector<8x128xf32>
    %c6_i32_36 = arith.constant 6 : i32
    %62 = vector.broadcast %c6_i32_36 : i32 to vector<8x128xi32>
    %63 = arith.cmpi eq, %45, %62 : vector<8x128xi32>
    %64 = arith.select %63, %44, %61 : vector<8x128xi1>, vector<8x128xf32>
    %c0_37 = arith.constant 0 : index
    %c0_38 = arith.constant 0 : index
    %65 = vector.load %arg12[%c0_37, %c0_38] : memref<8x128xf32, #tpu.memory_space<vmem>>, vector<8x128xf32>
    tpu.vector_store %arg12[%c0_37, %c0_38], %64 {strides = array<i32>} : memref<8x128xf32, #tpu.memory_space<vmem>>, vector<8x128xf32>,
    return
  }
}

</mosaic_0001>

<llo_original>
// kernel: u6_low_level_policy.1
$region0: #{u6_low_level_policy.1}
  #allocation0 [shape = 'u32[]', space=smem, size = 0x4, offset = 0x4, fixed_abs, tag = 'smem constant byte address 0x4 - core index']
  #allocation1 [shape = 'u32[144,128]{1,0:T(1,128)}', space=vmem, size = 0x12000, scoped, tag = 'internal scratch']
  %s0 = inlined_call_operand.vmem [shape: f32[8,23], index: 0, kind: input, shape index: {}]
  %s1 = inlined_call_operand.hbm [shape: bf16[23,176], index: 1, kind: input, shape index: {}]
  %s2 = inlined_call_operand.vmem [shape: f32[1,176], index: 2, kind: input, shape index: {}]
  %s3 = inlined_call_operand.vmem [shape: bf16[128,128], index: 3, kind: input, shape index: {}]
  %s4 = inlined_call_operand.vmem [shape: f32[1,128], index: 4, kind: input, shape index: {}]
  %s5 = inlined_call_operand.hbm [shape: bf16[128,128], index: 5, kind: input, shape index: {}]
  %s6 = inlined_call_operand.hbm [shape: bf16[48,128], index: 6, kind: input, shape index: {}]
  %s7 = inlined_call_operand.vmem [shape: f32[1,128], index: 7, kind: input, shape index: {}]
  %s8 = inlined_call_operand.hbm [shape: bf16[128,128], index: 8, kind: input, shape index: {}]
  %s9 = inlined_call_operand.vmem [shape: f32[1,128], index: 9, kind: input, shape index: {}]
  %s10 = inlined_call_operand.hbm [shape: bf16[128,128], index: 10, kind: input, shape index: {}]
  %s11 = inlined_call_operand.vmem [shape: f32[1,128], index: 11, kind: input, shape index: {}]
  %s12 = inlined_call_operand.vmem [shape: f32[8,128], index: 12, kind: output, shape index: {}]
  %s13 = sld [smem:[#allocation0]]
  $region78: #{u6_low_level_policy.1} parent=0
    _
  %s15 = ssub.s32 1, %s13
  %s16 = scalar_select 0, %s15, %s13
  $region1: #{u6_low_level_policy.1} parent=0
    #allocation2 [shape = 'u8[12288]{0}', space=vmem, size = 0x3000, scoped, tag = 'input window, operand 1, single buffered']
    #allocation3 [shape = 's32[1]{0}', space=sflag, size = 0x4, scoped, tag = 'scoped memory for u6_low_level_policy.1']
    #allocation4 [shape = 'u8[32768]{0}', space=vmem, size = 0x8000, scoped, tag = 'input window, operand 5, single buffered']
    #allocation5 [shape = 's32[1]{0}', space=sflag, size = 0x4, scoped, tag = 'scoped memory for u6_low_level_policy.1']
    #allocation6 [shape = 'u8[12288]{0}', space=vmem, size = 0x3000, scoped, tag = 'input window, operand 6, single buffered']
    #allocation7 [shape = 'u8[32768]{0}', space=vmem, size = 0x8000, scoped, tag = 'input window, operand 8, single buffered']
    #allocation8 [shape = 's32[1]{0}', space=sflag, size = 0x4, scoped, tag = 'scoped memory for u6_low_level_policy.1']
    #allocation9 [shape = 'u8[32768]{0}', space=vmem, size = 0x8000, scoped, tag = 'input window, operand 10, single buffered']
    %17 = vsyncpa [#allocation3], 0
    %18 = vsyncpa [#allocation5], 0
    %19 = vsyncpa [#allocation8], 0
    // Predicated region
    $region2: #{u6_low_level_policy.1} parent=1 // pred_check
      _
    $region3: #{u6_low_level_policy.1} parent=1 // pred_check_branch
      %21 = sbr.rel (0) target = $region5
    $region4: #{u6_low_level_policy.1} parent=1 // pred_region
      _
    $region5: #{u6_low_level_policy.1} parent=1 // pred_fallthru
      _
    // Predicated region
    $region6: #{u6_low_level_policy.1} parent=1 // pred_check
      _
    $region7: #{u6_low_level_policy.1} parent=1 // pred_check_branch
      %23 = sbr.rel (0) target = $region9
    $region8: #{u6_low_level_policy.1} parent=1 // pred_region
      %s25 = ssub.s32 384, 384
      %26 = vsyncadd [#allocation3], %s25
      %s27 = sshll.u32 [#allocation2], 4
      %s28 = int_to_ptr.vmem [resolvable:$true] %s27
      %33 = dma.hbm_to_vmem [thread:$0]  %s1, 384, %s28, [#allocation3], 128, 128, 8
    $region9: #{u6_low_level_policy.1} parent=1 // pred_fallthru
      _
    // Predicated region
    $region10: #{u6_low_level_policy.1} parent=1 // pred_check
      _
    $region11: #{u6_low_level_policy.1} parent=1 // pred_check_branch
      %35 = sbr.rel (0) target = $region13
    $region12: #{u6_low_level_policy.1} parent=1 // pred_region
      _
    $region13: #{u6_low_level_policy.1} parent=1 // pred_fallthru
      _
    // Predicated region
    $region14: #{u6_low_level_policy.1} parent=1 // pred_check
      _
    $region15: #{u6_low_level_policy.1} parent=1 // pred_check_branch
      %37 = sbr.rel (0) target = $region17
    $region16: #{u6_low_level_policy.1} parent=1 // pred_region
      _
    $region17: #{u6_low_level_policy.1} parent=1 // pred_fallthru
      _
    // Predicated region
    $region18: #{u6_low_level_policy.1} parent=1 // pred_check
      _
    $region19: #{u6_low_level_policy.1} parent=1 // pred_check_branch
      %39 = sbr.rel (0) target = $region21
    $region20: #{u6_low_level_policy.1} parent=1 // pred_region
      _
    $region21: #{u6_low_level_policy.1} parent=1 // pred_fallthru
      _
    // Predicated region
    $region22: #{u6_low_level_policy.1} parent=1 // pred_check
      _
    $region23: #{u6_low_level_policy.1} parent=1 // pred_check_branch
      %41 = sbr.rel (0) target = $region25
    $region24: #{u6_low_level_policy.1} parent=1 // pred_region
      %s43 = ssub.s32 1024, 1024
      %44 = vsyncadd [#allocation5], %s43
      %s45 = sshll.u32 [#allocation4], 4
      %s46 = int_to_ptr.vmem [resolvable:$true] %s45
      %51 = dma.hbm_to_vmem [thread:$0]  %s5, 1024, %s46, [#allocation5], 64, 64, 4
    $region25: #{u6_low_level_policy.1} parent=1 // pred_fallthru
      _
    // Predicated region
    $region26: #{u6_low_level_policy.1} parent=1 // pred_check
      _
    $region27: #{u6_low_level_policy.1} parent=1 // pred_check_branch
      %53 = sbr.rel (0) target = $region29
    $region28: #{u6_low_level_policy.1} parent=1 // pred_region
      %s55 = ssub.s32 384, 384
      %56 = vsyncadd [#allocation5], %s55
      %s57 = sshll.u32 [#allocation6], 4
      %s58 = int_to_ptr.vmem [resolvable:$true] %s57
      %63 = dma.hbm_to_vmem [thread:$0]  %s6, 384, %s58, [#allocation5], 64, 64, 4
    $region29: #{u6_low_level_policy.1} parent=1 // pred_fallthru
      _
    // Predicated region
    $region30: #{u6_low_level_policy.1} parent=1 // pred_check
      _
    $region31: #{u6_low_level_policy.1} parent=1 // pred_check_branch
      %65 = sbr.rel (0) target = $region33
    $region32: #{u6_low_level_policy.1} parent=1 // pred_region
      _
    $region33: #{u6_low_level_policy.1} parent=1 // pred_fallthru
      _
    // Predicated region
    $region34: #{u6_low_level_policy.1} parent=1 // pred_check
      _
    $region35: #{u6_low_level_policy.1} parent=1 // pred_check_branch
      %67 = sbr.rel (0) target = $region37
    $region36: #{u6_low_level_policy.1} parent=1 // pred_region
      %s69 = ssub.s32 1024, 1024
      %70 = vsyncadd [#allocation8], %s69
      %s71 = sshll.u32 [#allocation7], 4
      %s72 = int_to_ptr.vmem [resolvable:$true] %s71
      %77 = dma.hbm_to_vmem [thread:$0]  %s8, 1024, %s72, [#allocation8], 64, 64, 4
    $region37: #{u6_low_level_policy.1} parent=1 // pred_fallthru
      _
    // Predicated region
    $region38: #{u6_low_level_policy.1} parent=1 // pred_check
      _
    $region39: #{u6_low_level_policy.1} parent=1 // pred_check_branch
      %79 = sbr.rel (0) target = $region41
    $region40: #{u6_low_level_policy.1} parent=1 // pred_region
      _
    $region41: #{u6_low_level_policy.1} parent=1 // pred_fallthru
      _
    // Predicated region
    $region42: #{u6_low_level_policy.1} parent=1 // pred_check
      _
    $region43: #{u6_low_level_policy.1} parent=1 // pred_check_branch
      %81 = sbr.rel (0) target = $region45
    $region44: #{u6_low_level_policy.1} parent=1 // pred_region
      %s83 = ssub.s32 1024, 1024
      %84 = vsyncadd [#allocation8], %s83
      %s85 = sshll.u32 [#allocation9], 4
      %s86 = int_to_ptr.vmem [resolvable:$true] %s85
      %91 = dma.hbm_to_vmem [thread:$0]  %s10, 1024, %s86, [#allocation8], 64, 64, 4
    $region45: #{u6_low_level_policy.1} parent=1 // pred_fallthru
      _
    // Predicated region
    $region46: #{u6_low_level_policy.1} parent=1 // pred_check
      _
    $region47: #{u6_low_level_policy.1} parent=1 // pred_check_branch
      %93 = sbr.rel (0) target = $region49
    $region48: #{u6_low_level_policy.1} parent=1 // pred_region
      _
    $region49: #{u6_low_level_policy.1} parent=1 // pred_fallthru
      _
    // Predicated region
    $region50: #{u6_low_level_policy.1} parent=1 // pred_check
      _
    $region51: #{u6_low_level_policy.1} parent=1 // pred_check_branch
      %95 = sbr.rel (0) target = $region53
    $region52: #{u6_low_level_policy.1} parent=1 // pred_region
      %96 = dma.done [#allocation3], 384
    $region53: #{u6_low_level_policy.1} parent=1 // pred_fallthru
      _
    // Predicated region
    $region54: #{u6_low_level_policy.1} parent=1 // pred_check
      _
    $region55: #{u6_low_level_policy.1} parent=1 // pred_check_branch
      %98 = sbr.rel (0) target = $region57
    $region56: #{u6_low_level_policy.1} parent=1 // pred_region
      %99 = dma.done [#allocation5], 1024
    $region57: #{u6_low_level_policy.1} parent=1 // pred_fallthru
      _
    // Predicated region
    $region58: #{u6_low_level_policy.1} parent=1 // pred_check
      _
    $region59: #{u6_low_level_policy.1} parent=1 // pred_check_branch
      %101 = sbr.rel (0) target = $region61
    $region60: #{u6_low_level_policy.1} parent=1 // pred_region
      %102 = dma.done [#allocation5], 384
    $region61: #{u6_low_level_policy.1} parent=1 // pred_fallthru
      _
    // Predicated region
    $region62: #{u6_low_level_policy.1} parent=1 // pred_check
      _
    $region63: #{u6_low_level_policy.1} parent=1 // pred_check_branch
      %104 = sbr.rel (0) target = $region65
    $region64: #{u6_low_level_policy.1} parent=1 // pred_region
      %105 = dma.done [#allocation8], 1024
    $region65: #{u6_low_level_policy.1} parent=1 // pred_fallthru
      _
    // Predicated region
    $region66: #{u6_low_level_policy.1} parent=1 // pred_check
      _
    $region67: #{u6_low_level_policy.1} parent=1 // pred_check_branch
      %107 = sbr.rel (0) target = $region69
    $region68: #{u6_low_level_policy.1} parent=1 // pred_region
      %108 = dma.done [#allocation8], 1024
    $region69: #{u6_low_level_policy.1} parent=1 // pred_fallthru
      _
    %v110 = vld [vmem:[%s0] sm:$0xff]
    %v111 = vpack.c.bf16 %v110, %v110
    %v112 = vld [vmem:[#allocation2] sm:$0xff]
    %v113 = vld [vmem:[#allocation2 + $0x8] sm:$0xff]
    %v114 = vld [vmem:[#allocation2 + $0x10] sm:$0xff]
    %v115 = vld [vmem:[%s2] sm:$0x3]
    %v117 = vlaneseq
    %v118 = vshrl.u32 %v117, 7
    %v119 = vsub.s32 0, %v118
    %v120 = vrot.slane %v115, %v119
    %v121 = vlaneseq
    %v122 = vshrl.u32 %v121, 7
    %v123 = vsub.s32 1, %v122
    %v124 = vrot.slane %v115, %v123
    %v130 = vunpack.c.l.b16 %v112
    %v131 = vunpack.c.h.b16 %v112
    %v132 = vunpack.c.l.b16 %v113
    %v133 = vunpack.c.h.b16 %v113
    %v134 = vunpack.c.l.b16 %v114
    %v135 = vunpack.c.h.b16 %v114
    %v136 = vpack.c.b16 %v132, %v130
    %v137 = vpack.c.b16 %v133, %v131
    %v138 = vpack.c.b16 %v134, %v134
    %v139 = vpack.c.b16 %v135, %v135
    %vm142 = vcmask 187392
    %v144 = vsel %vm142, %v111, 0
    %vm146 = vcmask 1042432
    %vm147 = vcmask 1043456
    %v148 = vsel %vm146, 4294967295, 65535
    %v149 = vsel %vm147, %v148, 0
    %v151 = vand.u32 %v138, %v149
    %v154 = vand.u32 %v139, %v149
    %156 = vmatprep.subr.bf16.mxu0 %v137
    %157 = vmatpush1.bf16.msra.mxu0 %v136
    %158 = vmatprep.subr.bf16.mxu0 %v154
    %159 = vmatpush1.bf16.msra.mxu0 %v151
    %160 = vmatprep.subr.bf16.mxu0 0
    %161 = vmatpush1.bf16.msra.mxu0 0
    %162 = vmatprep.subr.bf16.mxu0 0
    %163 = vmatpush1.bf16.msra.mxu0 0
    %164 = vmatprep.subr.bf16.mxu0 0
    %165 = vmatpush1.bf16.msra.mxu0 0
    %166 = vmatprep.subr.bf16.mxu0 0
    %167 = vmatpush1.bf16.msra.mxu0 0
    %168 = vmatprep.subr.bf16.mxu0 0
    %169 = vmatpush1.bf16.msra.mxu0 0
    %170 = vmatprep.subr.bf16.mxu0 0
    %171 = vmatpush1.bf16.msra.mxu0 0
    %172 = vmatprep.subr.bf16.mxu0 0
    %173 = vmatpush1.bf16.msra.mxu0 0
    %174 = vmatprep.subr.bf16.mxu0 0
    %175 = vmatpush1.bf16.msra.mxu0 0
    %176 = vmatprep.subr.bf16.mxu0 0
    %177 = vmatpush1.bf16.msra.mxu0 0
    %178 = vmatprep.subr.bf16.mxu0 0
    %179 = vmatpush1.bf16.msra.mxu0 0
    %180 = vmatprep.subr.bf16.mxu0 0
    %181 = vmatpush1.bf16.msra.mxu0 0
    %182 = vmatprep.subr.bf16.mxu0 0
    %183 = vmatpush1.bf16.msra.mxu0 0
    %184 = vmatprep.subr.bf16.mxu0 0
    %185 = vmatpush1.bf16.msra.mxu0 0
    %186 = vmatprep.subr.bf16.mxu0 0
    %187 = vmatpush1.bf16.msra.mxu0 0
    %188 = vmatprep.mubr.bf16.mxu0 0
    %189 = vmatmul.mubr.bf16.gmra.mrb[0].mxu0 %v144
    %v190 = vpop.f32.mrb[0].mxu0
    %v191 = vadd.f32 %v120, %v190
    %v192 = vpop.f32.mrb[0].mxu0
    %v193 = vadd.f32 %v124, %v192
    %v194 = vpop.f32.mrb[0].mxu0
    %v195 = vpop.f32.mrb[0].mxu0
    %196 = vdwg.mxu0
    %v197 = vmax.f32 %v191, 0.0
    %v198 = vmax.f32 %v193, 0.0
    %v199 = vpack.c.bf16 %v197, %v197
    %v200 = vld [vmem:[%s3] sm:$0xf]
    %v201 = vld [vmem:[%s3 + $0x4] sm:$0xf]
    %v202 = vld [vmem:[%s3 + $0x8] sm:$0xf]
    %v203 = vld [vmem:[%s3 + $0xc] sm:$0xf]
    %v204 = vld [vmem:[%s3 + $0x10] sm:$0xf]
    %v205 = vld [vmem:[%s3 + $0x14] sm:$0xf]
    %v206 = vld [vmem:[%s3 + $0x18] sm:$0xf]
    %v207 = vld [vmem:[%s3 + $0x1c] sm:$0xf]
    %v208 = vld [vmem:[%s3 + $0x20] sm:$0xf]
    %v209 = vld [vmem:[%s3 + $0x24] sm:$0xf]
    %v210 = vld [vmem:[%s3 + $0x28] sm:$0xf]
    %v211 = vld [vmem:[%s3 + $0x2c] sm:$0xf]
    %v212 = vld [vmem:[%s3 + $0x30] sm:$0xf]
    %v213 = vld [vmem:[%s3 + $0x34] sm:$0xf]
    %v214 = vld [vmem:[%s3 + $0x38] sm:$0xf]
    %v215 = vld [vmem:[%s3 + $0x3c] sm:$0xf]
    %v216 = vld [vmem:[%s4] sm:$0x1]
    %v218 = vlaneseq
    %v219 = vshrl.u32 %v218, 7
    %v220 = vsub.s32 0, %v219
    %v221 = vrot.slane %v216, %v220
    %v239 = vunpack.c.l.b16 %v200
    %v240 = vunpack.c.l.b16 %v201
    %v241 = vunpack.c.l.b16 %v202
    %v242 = vunpack.c.l.b16 %v203
    %v243 = vunpack.c.l.b16 %v204
    %v244 = vunpack.c.l.b16 %v205
    %v245 = vunpack.c.l.b16 %v206
    %v246 = vunpack.c.l.b16 %v207
    %v247 = vunpack.c.l.b16 %v208
    %v248 = vunpack.c.l.b16 %v209
    %v249 = vunpack.c.l.b16 %v210
    %v250 = vunpack.c.l.b16 %v211
    %v251 = vunpack.c.l.b16 %v212
    %v252 = vunpack.c.l.b16 %v213
    %v253 = vunpack.c.l.b16 %v214
    %v254 = vunpack.c.l.b16 %v215
    %v255 = vpack.c.b16 %v240, %v239
    %v256 = vpack.c.b16 %v242, %v241
    %v257 = vpack.c.b16 %v244, %v243
    %v258 = vpack.c.b16 %v246, %v245
    %v259 = vpack.c.b16 %v248, %v247
    %v260 = vpack.c.b16 %v250, %v249
    %v261 = vpack.c.b16 %v252, %v251
    %v262 = vpack.c.b16 %v254, %v253
    %271 = vmatprep.subr.bf16.mxu0 0
    %272 = vmatpush1.bf16.msra.mxu0 %v255
    %273 = vmatprep.subr.bf16.mxu0 0
    %274 = vmatpush1.bf16.msra.mxu0 %v256
    %275 = vmatprep.subr.bf16.mxu0 0
    %276 = vmatpush1.bf16.msra.mxu0 %v257
    %277 = vmatprep.subr.bf16.mxu0 0
    %278 = vmatpush1.bf16.msra.mxu0 %v258
    %279 = vmatprep.subr.bf16.mxu0 0
    %280 = vmatpush1.bf16.msra.mxu0 %v259
    %281 = vmatprep.subr.bf16.mxu0 0
    %282 = vmatpush1.bf16.msra.mxu0 %v260
    %283 = vmatprep.subr.bf16.mxu0 0
    %284 = vmatpush1.bf16.msra.mxu0 %v261
    %285 = vmatprep.subr.bf16.mxu0 0
    %286 = vmatpush1.bf16.msra.mxu0 %v262
    %287 = vmatprep.subr.bf16.mxu0 0
    %288 = vmatpush1.bf16.msra.mxu0 0
    %289 = vmatprep.subr.bf16.mxu0 0
    %290 = vmatpush1.bf16.msra.mxu0 0
    %291 = vmatprep.subr.bf16.mxu0 0
    %292 = vmatpush1.bf16.msra.mxu0 0
    %293 = vmatprep.subr.bf16.mxu0 0
    %294 = vmatpush1.bf16.msra.mxu0 0
    %295 = vmatprep.subr.bf16.mxu0 0
    %296 = vmatpush1.bf16.msra.mxu0 0
    %297 = vmatprep.subr.bf16.mxu0 0
    %298 = vmatpush1.bf16.msra.mxu0 0
    %299 = vmatprep.subr.bf16.mxu0 0
    %300 = vmatpush1.bf16.msra.mxu0 0
    %301 = vmatprep.subr.bf16.mxu0 0
    %302 = vmatpush1.bf16.msra.mxu0 0
    %303 = vmatprep.mubr.bf16.mxu0 0
    %304 = vmatmul.mubr.bf16.gmra.mrb[0].mxu0 %v199
    %v305 = vpop.f32.mrb[0].mxu0
    %v306 = vadd.f32 %v221, %v305
    %v307 = vpop.f32.mrb[0].mxu0
    %v308 = vpop.f32.mrb[0].mxu0
    %v309 = vpop.f32.mrb[0].mxu0
    %310 = vdwg.mxu0
    %v311 = vmax.f32 %v306, 0.0
    %v312 = vpack.c.bf16 %v311, %v311
    %v313 = vld [vmem:[#allocation4] sm:$0xf]
    %v314 = vld [vmem:[#allocation4 + $0x4] sm:$0xf]
    %v315 = vld [vmem:[#allocation4 + $0x8] sm:$0xf]
    %v316 = vld [vmem:[#allocation4 + $0xc] sm:$0xf]
    %v317 = vld [vmem:[#allocation4 + $0x10] sm:$0xf]
    %v318 = vld [vmem:[#allocation4 + $0x14] sm:$0xf]
    %v319 = vld [vmem:[#allocation4 + $0x18] sm:$0xf]
    %v320 = vld [vmem:[#allocation4 + $0x1c] sm:$0xf]
    %v321 = vld [vmem:[#allocation4 + $0x20] sm:$0xf]
    %v322 = vld [vmem:[#allocation4 + $0x24] sm:$0xf]
    %v323 = vld [vmem:[#allocation4 + $0x28] sm:$0xf]
    %v324 = vld [vmem:[#allocation4 + $0x2c] sm:$0xf]
    %v325 = vld [vmem:[#allocation4 + $0x30] sm:$0xf]
    %v326 = vld [vmem:[#allocation4 + $0x34] sm:$0xf]
    %v327 = vld [vmem:[#allocation4 + $0x38] sm:$0xf]
    %v328 = vld [vmem:[#allocation4 + $0x3c] sm:$0xf]
    %v329 = vpack.c.bf16 %v198, %v198
    %v330 = vld [vmem:[#allocation6] sm:$0xf]
    %v331 = vld [vmem:[#allocation6 + $0x4] sm:$0xf]
    %v332 = vld [vmem:[#allocation6 + $0x8] sm:$0xf]
    %v333 = vld [vmem:[#allocation6 + $0xc] sm:$0xf]
    %v334 = vld [vmem:[#allocation6 + $0x10] sm:$0xf]
    %v335 = vld [vmem:[#allocation6 + $0x14] sm:$0xf]
    %v342 = vunpack.c.l.b16 %v330
    %v343 = vunpack.c.l.b16 %v331
    %v344 = vunpack.c.l.b16 %v332
    %v345 = vunpack.c.l.b16 %v333
    %v346 = vunpack.c.l.b16 %v334
    %v347 = vunpack.c.l.b16 %v335
    %v348 = vpack.c.b16 %v343, %v342
    %v349 = vpack.c.b16 %v345, %v344
    %v350 = vpack.c.b16 %v347, %v346
    %vm354 = vcmask 392192
    %v356 = vsel %vm354, %v329, 0
    %358 = vmatprep.subr.bf16.mxu0 0
    %359 = vmatpush1.bf16.msra.mxu0 %v348
    %360 = vmatprep.subr.bf16.mxu0 0
    %361 = vmatpush1.bf16.msra.mxu0 %v349
    %362 = vmatprep.subr.bf16.mxu0 0
    %363 = vmatpush1.bf16.msra.mxu0 %v350
    %364 = vmatprep.subr.bf16.mxu0 0
    %365 = vmatpush1.bf16.msra.mxu0 0
    %366 = vmatprep.subr.bf16.mxu0 0
    %367 = vmatpush1.bf16.msra.mxu0 0
    %368 = vmatprep.subr.bf16.mxu0 0
    %369 = vmatpush1.bf16.msra.mxu0 0
    %370 = vmatprep.subr.bf16.mxu0 0
    %371 = vmatpush1.bf16.msra.mxu0 0
    %372 = vmatprep.subr.bf16.mxu0 0
    %373 = vmatpush1.bf16.msra.mxu0 0
    %374 = vmatprep.subr.bf16.mxu0 0
    %375 = vmatpush1.bf16.msra.mxu0 0
    %376 = vmatprep.subr.bf16.mxu0 0
    %377 = vmatpush1.bf16.msra.mxu0 0
    %378 = vmatprep.subr.bf16.mxu0 0
    %379 = vmatpush1.bf16.msra.mxu0 0
    %380 = vmatprep.subr.bf16.mxu0 0
    %381 = vmatpush1.bf16.msra.mxu0 0
    %382 = vmatprep.subr.bf16.mxu0 0
    %383 = vmatpush1.bf16.msra.mxu0 0
    %384 = vmatprep.subr.bf16.mxu0 0
    %385 = vmatpush1.bf16.msra.mxu0 0
    %386 = vmatprep.subr.bf16.mxu0 0
    %387 = vmatpush1.bf16.msra.mxu0 0
    %388 = vmatprep.subr.bf16.mxu0 0
    %389 = vmatpush1.bf16.msra.mxu0 0
    %390 = vmatprep.mubr.bf16.mxu0 0
    %391 = vmatmul.mubr.bf16.gmra.mrb[0].mxu0 %v356
    %v392 = vpop.f32.mrb[0].mxu0
    %v393 = vadd.f32 0.0, %v392
    %v394 = vpop.f32.mrb[0].mxu0
    %v395 = vpop.f32.mrb[0].mxu0
    %v396 = vpop.f32.mrb[0].mxu0
    %397 = vdwg.mxu0
    %v414 = vunpack.c.l.b16 %v313
    %v415 = vunpack.c.l.b16 %v314
    %v416 = vunpack.c.l.b16 %v315
    %v417 = vunpack.c.l.b16 %v316
    %v418 = vunpack.c.l.b16 %v317
    %v419 = vunpack.c.l.b16 %v318
    %v420 = vunpack.c.l.b16 %v319
    %v421 = vunpack.c.l.b16 %v320
    %v422 = vunpack.c.l.b16 %v321
    %v423 = vunpack.c.l.b16 %v322
    %v424 = vunpack.c.l.b16 %v323
    %v425 = vunpack.c.l.b16 %v324
    %v426 = vunpack.c.l.b16 %v325
    %v427 = vunpack.c.l.b16 %v326
    %v428 = vunpack.c.l.b16 %v327
    %v429 = vunpack.c.l.b16 %v328
    %v430 = vpack.c.b16 %v415, %v414
    %v431 = vpack.c.b16 %v417, %v416
    %v432 = vpack.c.b16 %v419, %v418
    %v433 = vpack.c.b16 %v421, %v420
    %v434 = vpack.c.b16 %v423, %v422
    %v435 = vpack.c.b16 %v425, %v424
    %v436 = vpack.c.b16 %v427, %v426
    %v437 = vpack.c.b16 %v429, %v428
    %446 = vmatprep.subr.bf16.mxu0 0
    %447 = vmatpush1.bf16.msra.mxu0 %v430
    %448 = vmatprep.subr.bf16.mxu0 0
    %449 = vmatpush1.bf16.msra.mxu0 %v431
    %450 = vmatprep.subr.bf16.mxu0 0
    %451 = vmatpush1.bf16.msra.mxu0 %v432
    %452 = vmatprep.subr.bf16.mxu0 0
    %453 = vmatpush1.bf16.msra.mxu0 %v433
    %454 = vmatprep.subr.bf16.mxu0 0
    %455 = vmatpush1.bf16.msra.mxu0 %v434
    %456 = vmatprep.subr.bf16.mxu0 0
    %457 = vmatpush1.bf16.msra.mxu0 %v435
    %458 = vmatprep.subr.bf16.mxu0 0
    %459 = vmatpush1.bf16.msra.mxu0 %v436
    %460 = vmatprep.subr.bf16.mxu0 0
    %461 = vmatpush1.bf16.msra.mxu0 %v437
    %462 = vmatprep.subr.bf16.mxu0 0
    %463 = vmatpush1.bf16.msra.mxu0 0
    %464 = vmatprep.subr.bf16.mxu0 0
    %465 = vmatpush1.bf16.msra.mxu0 0
    %466 = vmatprep.subr.bf16.mxu0 0
    %467 = vmatpush1.bf16.msra.mxu0 0
    %468 = vmatprep.subr.bf16.mxu0 0
    %469 = vmatpush1.bf16.msra.mxu0 0
    %470 = vmatprep.subr.bf16.mxu0 0
    %471 = vmatpush1.bf16.msra.mxu0 0
    %472 = vmatprep.subr.bf16.mxu0 0
    %473 = vmatpush1.bf16.msra.mxu0 0
    %474 = vmatprep.subr.bf16.mxu0 0
    %475 = vmatpush1.bf16.msra.mxu0 0
    %476 = vmatprep.subr.bf16.mxu0 0
    %477 = vmatpush1.bf16.msra.mxu0 0
    %478 = vmatprep.mubr.bf16.mxu0 0
    %479 = vmatmul.mubr.bf16.gmra.mrb[0].mxu0 %v312
    %v480 = vpop.f32.mrb[0].mxu0
    %v481 = vadd.f32 %v393, %v480
    %v482 = vpop.f32.mrb[0].mxu0
    %v483 = vpop.f32.mrb[0].mxu0
    %v484 = vpop.f32.mrb[0].mxu0
    %485 = vdwg.mxu0
    %v486 = vld [vmem:[%s7] sm:$0x1]
    %v488 = vlaneseq
    %v489 = vshrl.u32 %v488, 7
    %v490 = vsub.s32 0, %v489
    %v491 = vrot.slane %v486, %v490
    %v493 = vadd.f32 %v481, %v491
    %v494 = vmax.f32 %v493, 0.0
    %v495 = vpack.c.bf16 %v494, %v494
    %v496 = vld [vmem:[#allocation7] sm:$0xf]
    %v497 = vld [vmem:[#allocation7 + $0x4] sm:$0xf]
    %v498 = vld [vmem:[#allocation7 + $0x8] sm:$0xf]
    %v499 = vld [vmem:[#allocation7 + $0xc] sm:$0xf]
    %v500 = vld [vmem:[#allocation7 + $0x10] sm:$0xf]
    %v501 = vld [vmem:[#allocation7 + $0x14] sm:$0xf]
    %v502 = vld [vmem:[#allocation7 + $0x18] sm:$0xf]
    %v503 = vld [vmem:[#allocation7 + $0x1c] sm:$0xf]
    %v504 = vld [vmem:[#allocation7 + $0x20] sm:$0xf]
    %v505 = vld [vmem:[#allocation7 + $0x24] sm:$0xf]
    %v506 = vld [vmem:[#allocation7 + $0x28] sm:$0xf]
    %v507 = vld [vmem:[#allocation7 + $0x2c] sm:$0xf]
    %v508 = vld [vmem:[#allocation7 + $0x30] sm:$0xf]
    %v509 = vld [vmem:[#allocation7 + $0x34] sm:$0xf]
    %v510 = vld [vmem:[#allocation7 + $0x38] sm:$0xf]
    %v511 = vld [vmem:[#allocation7 + $0x3c] sm:$0xf]
    %v512 = vld [vmem:[%s9] sm:$0x1]
    %v514 = vlaneseq
    %v515 = vshrl.u32 %v514, 7
    %v516 = vsub.s32 0, %v515
    %v517 = vrot.slane %v512, %v516
    %v535 = vunpack.c.l.b16 %v496
    %v536 = vunpack.c.l.b16 %v497
    %v537 = vunpack.c.l.b16 %v498
    %v538 = vunpack.c.l.b16 %v499
    %v539 = vunpack.c.l.b16 %v500
    %v540 = vunpack.c.l.b16 %v501
    %v541 = vunpack.c.l.b16 %v502
    %v542 = vunpack.c.l.b16 %v503
    %v543 = vunpack.c.l.b16 %v504
    %v544 = vunpack.c.l.b16 %v505
    %v545 = vunpack.c.l.b16 %v506
    %v546 = vunpack.c.l.b16 %v507
    %v547 = vunpack.c.l.b16 %v508
    %v548 = vunpack.c.l.b16 %v509
    %v549 = vunpack.c.l.b16 %v510
    %v550 = vunpack.c.l.b16 %v511
    %v551 = vpack.c.b16 %v536, %v535
    %v552 = vpack.c.b16 %v538, %v537
    %v553 = vpack.c.b16 %v540, %v539
    %v554 = vpack.c.b16 %v542, %v541
    %v555 = vpack.c.b16 %v544, %v543
    %v556 = vpack.c.b16 %v546, %v545
    %v557 = vpack.c.b16 %v548, %v547
    %v558 = vpack.c.b16 %v550, %v549
    %567 = vmatprep.subr.bf16.mxu0 0
    %568 = vmatpush1.bf16.msra.mxu0 %v551
    %569 = vmatprep.subr.bf16.mxu0 0
    %570 = vmatpush1.bf16.msra.mxu0 %v552
    %571 = vmatprep.subr.bf16.mxu0 0
    %572 = vmatpush1.bf16.msra.mxu0 %v553
    %573 = vmatprep.subr.bf16.mxu0 0
    %574 = vmatpush1.bf16.msra.mxu0 %v554
    %575 = vmatprep.subr.bf16.mxu0 0
    %576 = vmatpush1.bf16.msra.mxu0 %v555
    %577 = vmatprep.subr.bf16.mxu0 0
    %578 = vmatpush1.bf16.msra.mxu0 %v556
    %579 = vmatprep.subr.bf16.mxu0 0
    %580 = vmatpush1.bf16.msra.mxu0 %v557
    %581 = vmatprep.subr.bf16.mxu0 0
    %582 = vmatpush1.bf16.msra.mxu0 %v558
    %583 = vmatprep.subr.bf16.mxu0 0
    %584 = vmatpush1.bf16.msra.mxu0 0
    %585 = vmatprep.subr.bf16.mxu0 0
    %586 = vmatpush1.bf16.msra.mxu0 0
    %587 = vmatprep.subr.bf16.mxu0 0
    %588 = vmatpush1.bf16.msra.mxu0 0
    %589 = vmatprep.subr.bf16.mxu0 0
    %590 = vmatpush1.bf16.msra.mxu0 0
    %591 = vmatprep.subr.bf16.mxu0 0
    %592 = vmatpush1.bf16.msra.mxu0 0
    %593 = vmatprep.subr.bf16.mxu0 0
    %594 = vmatpush1.bf16.msra.mxu0 0
    %595 = vmatprep.subr.bf16.mxu0 0
    %596 = vmatpush1.bf16.msra.mxu0 0
    %597 = vmatprep.subr.bf16.mxu0 0
    %598 = vmatpush1.bf16.msra.mxu0 0
    %599 = vmatprep.mubr.bf16.mxu0 0
    %600 = vmatmul.mubr.bf16.gmra.mrb[0].mxu0 %v495
    %v601 = vpop.f32.mrb[0].mxu0
    %v602 = vadd.f32 %v517, %v601
    %v603 = vpop.f32.mrb[0].mxu0
    %v604 = vpop.f32.mrb[0].mxu0
    %v605 = vpop.f32.mrb[0].mxu0
    %606 = vdwg.mxu0
    %v607 = vmax.f32 %v602, 0.0
    %v608 = vpack.c.bf16 %v607, %v607
    %v609 = vld [vmem:[#allocation9] sm:$0xf]
    %v610 = vld [vmem:[#allocation9 + $0x4] sm:$0xf]
    %v611 = vld [vmem:[#allocation9 + $0x8] sm:$0xf]
    %v612 = vld [vmem:[#allocation9 + $0xc] sm:$0xf]
    %v613 = vld [vmem:[#allocation9 + $0x10] sm:$0xf]
    %v614 = vld [vmem:[#allocation9 + $0x14] sm:$0xf]
    %v615 = vld [vmem:[#allocation9 + $0x18] sm:$0xf]
    %v616 = vld [vmem:[#allocation9 + $0x1c] sm:$0xf]
    %v617 = vld [vmem:[#allocation9 + $0x20] sm:$0xf]
    %v618 = vld [vmem:[#allocation9 + $0x24] sm:$0xf]
    %v619 = vld [vmem:[#allocation9 + $0x28] sm:$0xf]
    %v620 = vld [vmem:[#allocation9 + $0x2c] sm:$0xf]
    %v621 = vld [vmem:[#allocation9 + $0x30] sm:$0xf]
    %v622 = vld [vmem:[#allocation9 + $0x34] sm:$0xf]
    %v623 = vld [vmem:[#allocation9 + $0x38] sm:$0xf]
    %v624 = vld [vmem:[#allocation9 + $0x3c] sm:$0xf]
    %v625 = vld [vmem:[%s11] sm:$0x1]
    %v627 = vlaneseq
    %v628 = vshrl.u32 %v627, 7
    %v629 = vsub.s32 0, %v628
    %v630 = vrot.slane %v625, %v629
    %v648 = vunpack.c.l.b16 %v609
    %v649 = vunpack.c.l.b16 %v610
    %v650 = vunpack.c.l.b16 %v611
    %v651 = vunpack.c.l.b16 %v612
    %v652 = vunpack.c.l.b16 %v613
    %v653 = vunpack.c.l.b16 %v614
    %v654 = vunpack.c.l.b16 %v615
    %v655 = vunpack.c.l.b16 %v616
    %v656 = vunpack.c.l.b16 %v617
    %v657 = vunpack.c.l.b16 %v618
    %v658 = vunpack.c.l.b16 %v619
    %v659 = vunpack.c.l.b16 %v620
    %v660 = vunpack.c.l.b16 %v621
    %v661 = vunpack.c.l.b16 %v622
    %v662 = vunpack.c.l.b16 %v623
    %v663 = vunpack.c.l.b16 %v624
    %v664 = vpack.c.b16 %v649, %v648
    %v665 = vpack.c.b16 %v651, %v650
    %v666 = vpack.c.b16 %v653, %v652
    %v667 = vpack.c.b16 %v655, %v654
    %v668 = vpack.c.b16 %v657, %v656
    %v669 = vpack.c.b16 %v659, %v658
    %v670 = vpack.c.b16 %v661, %v660
    %v671 = vpack.c.b16 %v663, %v662
    %680 = vmatprep.subr.bf16.mxu0 0
    %681 = vmatpush1.bf16.msra.mxu0 %v664
    %682 = vmatprep.subr.bf16.mxu0 0
    %683 = vmatpush1.bf16.msra.mxu0 %v665
    %684 = vmatprep.subr.bf16.mxu0 0
    %685 = vmatpush1.bf16.msra.mxu0 %v666
    %686 = vmatprep.subr.bf16.mxu0 0
    %687 = vmatpush1.bf16.msra.mxu0 %v667
    %688 = vmatprep.subr.bf16.mxu0 0
    %689 = vmatpush1.bf16.msra.mxu0 %v668
    %690 = vmatprep.subr.bf16.mxu0 0
    %691 = vmatpush1.bf16.msra.mxu0 %v669
    %692 = vmatprep.subr.bf16.mxu0 0
    %693 = vmatpush1.bf16.msra.mxu0 %v670
    %694 = vmatprep.subr.bf16.mxu0 0
    %695 = vmatpush1.bf16.msra.mxu0 %v671
    %696 = vmatprep.subr.bf16.mxu0 0
    %697 = vmatpush1.bf16.msra.mxu0 0
    %698 = vmatprep.subr.bf16.mxu0 0
    %699 = vmatpush1.bf16.msra.mxu0 0
    %700 = vmatprep.subr.bf16.mxu0 0
    %701 = vmatpush1.bf16.msra.mxu0 0
    %702 = vmatprep.subr.bf16.mxu0 0
    %703 = vmatpush1.bf16.msra.mxu0 0
    %704 = vmatprep.subr.bf16.mxu0 0
    %705 = vmatpush1.bf16.msra.mxu0 0
    %706 = vmatprep.subr.bf16.mxu0 0
    %707 = vmatpush1.bf16.msra.mxu0 0
    %708 = vmatprep.subr.bf16.mxu0 0
    %709 = vmatpush1.bf16.msra.mxu0 0
    %710 = vmatprep.subr.bf16.mxu0 0
    %711 = vmatpush1.bf16.msra.mxu0 0
    %712 = vmatprep.mubr.bf16.mxu0 0
    %713 = vmatmul.mubr.bf16.gmra.mrb[0].mxu0 %v608
    %v714 = vpop.f32.mrb[0].mxu0
    %v715 = vadd.f32 %v630, %v714
    %v716 = vpop.f32.mrb[0].mxu0
    %v717 = vpop.f32.mrb[0].mxu0
    %v718 = vpop.f32.mrb[0].mxu0
    %719 = vdwg.mxu0
    %v720 = vlaneseq
    %v721 = vand.u32 %v720, 127
    %vm722 = vcmp.lt.s32.totalorder %v721, 6
    %v723 = vsel %vm722, %v715, -inf
    %724 = vmax.xlane.f32.xlu0 %v723
    %v725 = vpop.xlane.xlu0 %724
    %v726 = vsub.f32 %v723, %v725
    %v727 = vmul.f32 %v726, 1.442695
    %v728 = vpow.pop %v727
    %v729 = vsel %vm722, %v728, 0.0
    %730 = vadd.xlane.f32.xlu0 %v729
    %v731 = vpop.xlane.xlu0 %730
    %v732 = vrcp.pop %v731
    %v733 = vmul.f32 %v729, %v732
    %vm734 = vcmp.eq.s32.totalorder %v721, 6
    %v735 = vsel %vm734, %v715, %v733
    %736 = vst [vmem:[%s12] sm:$0xff] %v735
    // Predicated region
    $region70: #{u6_low_level_policy.1} parent=1 // pred_check
      _
    $region71: #{u6_low_level_policy.1} parent=1 // pred_check_branch
      %738 = sbr.rel (0) target = $region73
    $region72: #{u6_low_level_policy.1} parent=1 // pred_region
      _
    $region73: #{u6_low_level_policy.1} parent=1 // pred_fallthru
      _
    // Predicated region
    $region74: #{u6_low_level_policy.1} parent=1 // pred_check
      _
    $region75: #{u6_low_level_policy.1} parent=1 // pred_check_branch
      %740 = sbr.rel (0) target = $region77
    $region76: #{u6_low_level_policy.1} parent=1 // pred_region
      _
    $region77: #{u6_low_level_policy.1} parent=1 // pred_fallthru
      _
    %741 = vsyncpa [#allocation3], 1
    %742 = vsyncpa [#allocation5], 1
    %743 = vsyncpa [#allocation8], 1

</llo_original>
